<compile_context>
chip_gen: v7x
topology: tpu7x:2x2x1
jax: 0.10.0
libtpu: 0.0.40
codegen_flags: <defaults>
</compile_context>

<pallas_src>
import functools

import jax
import jax.numpy as jnp
from jax.experimental import pallas as pl
from jax.experimental.pallas import tpu as pltpu

_H1, _H2, _H3 = 100, 50, 30
_LANES = 128
_BIAS_ROWS = 16          # 16-row bias block keeps bf16 slices (16,128)-aligned
_ROW_ALIGN = 16


def _round_up(n, m):
    return ((n + m - 1) // m) * m


def _cdiv(a, b):
    return -(-a // b)


def _actor_kernel(slab_ref, x_ref, o_ref, *, s_pad):
    """Fused 4-layer MLP over one batch tile.

    slab_ref rows: [0,_BIAS_ROWS) biases (b1..b4 in rows 0..3, zero-padded
    lanes), then W1 (s_pad x 128), then three 128-row blocks for W2, W3, W4.
    Zero-padded weight rows/lanes keep the padded lanes exactly 0 through the
    ReLU chain.
    """
    off1 = _BIAS_ROWS
    off2 = off1 + s_pad
    off3 = off2 + _LANES
    off4 = off3 + _LANES

    cdt = slab_ref.dtype                                   # bf16 compute dtype

    x = x_ref[...].astype(cdt)                              # (TB, s_pad)

    # Layer 1: (TB, s_pad) @ (s_pad, 128) -> +bias -> relu  (f32 accumulate)
    h = jnp.dot(x, slab_ref[off1:off2, :],
                preferred_element_type=jnp.float32)
    h = jnp.maximum(h + slab_ref[0:1, :].astype(jnp.float32), 0.0)

    # Layer 2: (TB, 128) @ (128, 128)
    h = jnp.dot(h.astype(cdt), slab_ref[off2:off3, :],
                preferred_element_type=jnp.float32)
    h = jnp.maximum(h + slab_ref[1:2, :].astype(jnp.float32), 0.0)

    # Layer 3
    h = jnp.dot(h.astype(cdt), slab_ref[off3:off4, :],
                preferred_element_type=jnp.float32)
    h = jnp.maximum(h + slab_ref[2:3, :].astype(jnp.float32), 0.0)

    # Layer 4 + sigmoid (tanh form: rides the EUP slot, no VPU divide)
    z = jnp.dot(h.astype(cdt), slab_ref[off4:off4 + _LANES, :],
                preferred_element_type=jnp.float32)
    z = z + slab_ref[3:4, :].astype(jnp.float32)
    o_ref[...] = (0.5 * (jnp.tanh(0.5 * z) + 1.0)).astype(o_ref.dtype)


def pack_params(params, state_dim, a_dim, *, param_dtype=jnp.bfloat16):
    """Pack w1..w4 / b1..b4 into one lane-aligned (rows, 128) slab.

    Stored in bf16 by default so all four matmuls take the native MXU path.
    """
    s_pad = _round_up(state_dim, _ROW_ALIGN)

    def pad_w(w, rows):
        w = jnp.asarray(w, jnp.float32)
        r, c = w.shape
        return jnp.pad(w, ((0, rows - r), (0, _LANES - c)))

    bias = jnp.zeros((_BIAS_ROWS, _LANES), jnp.float32)
    for i, name in enumerate(("b1", "b2", "b3", "b4")):
        b = jnp.asarray(params[name], jnp.float32).reshape(-1)
        bias = bias.at[i, : b.shape[0]].set(b)

    slab = jnp.concatenate(
        [bias,
         pad_w(params["w1"], s_pad),      # (s_pad, 128)
         pad_w(params["w2"], _LANES),     # (128, 128)
         pad_w(params["w3"], _LANES),
         pad_w(params["w4"], _LANES)],
        axis=0)
    return slab.astype(param_dtype)


def actor_net_forward(x, slab, state_dim, a_dim, *, batch_block=1024,
                      out_dtype=jnp.float32):
    """x: (B, state_dim) f32; slab: output of pack_params."""
    B = x.shape[0]
    s_pad = _round_up(state_dim, _ROW_ALIGN)
    slab_rows = slab.shape[0]
    assert slab_rows == _BIAS_ROWS + s_pad + 3 * _LANES, "slab/state_dim mismatch"

    b_pad8 = _round_up(B, 8)
    tb = min(batch_block, b_pad8)                 # batch tile (multiple of 8)
    # v7x megacore: make sure the "parallel" batch axis has >= 2 grid steps
    # whenever the padded batch allows it, so both TensorCores get work.
    if b_pad8 // tb < 2 and b_pad8 >= 16:
        tb = _round_up(_cdiv(b_pad8, 2), 8)
    grid = _cdiv(b_pad8, tb)
    b_pad = grid * tb

    # Cheap input prep: pass through when already aligned, else a single pad.
    x = x.astype(jnp.float32)
    if b_pad == B and s_pad == state_dim:
        x_in = x
    else:
        x_in = jnp.pad(x, ((0, b_pad - B), (0, s_pad - state_dim)))

    out = pl.pallas_call(
        functools.partial(_actor_kernel, s_pad=s_pad),
        out_shape=jax.ShapeDtypeStruct((b_pad, _LANES), out_dtype),
        grid=(grid,),
        in_specs=[
            # Whole parameter slab, constant index_map -> stays VMEM-resident.
            pl.BlockSpec((slab_rows, _LANES), lambda i: (0, 0)),
            # x streams one batch tile per grid step.
            pl.BlockSpec((tb, s_pad), lambda i: (i, 0)),
        ],
        out_specs=pl.BlockSpec((tb, _LANES), lambda i: (i, 0)),
        compiler_params=pltpu.CompilerParams(
            dimension_semantics=("parallel",)),
    )(slab, x_in)

    return out[:B, :a_dim]


def init_params(key, state_dim, a_dim):
    """Matches nn.init.normal_(w, 0, 0.1), bias=0.1; weights stored (in, out)."""
    dims = [(state_dim, _H1), (_H1, _H2), (_H2, _H3), (_H3, a_dim)]
    params = {}
    keys = jax.random.split(key, len(dims))
    for i, ((din, dout), k) in enumerate(zip(dims, keys), start=1):
        params[f"w{i}"] = 0.1 * jax.random.normal(k, (din, dout), jnp.float32)
        params[f"b{i}"] = jnp.full((1, dout), 0.1, jnp.float32)
    return params


def actor_net_reference(x, params):
    h = jnp.maximum(x @ params["w1"] + params["b1"], 0.0)
    h = jnp.maximum(h @ params["w2"] + params["b2"], 0.0)
    h = jnp.maximum(h @ params["w3"] + params["b3"], 0.0)
    return jax.nn.sigmoid(h @ params["w4"] + params["b4"])


if __name__ == "__main__":
    key = jax.random.PRNGKey(0)
    k_x, k_p = jax.random.split(key)

    batch = 2
    state_dim = 16
    a_dim = 8

    x = jax.random.normal(k_x, (batch, state_dim), jnp.float32)
    params = init_params(k_p, state_dim, a_dim)
    slab = pack_params(params, state_dim, a_dim)          # bf16 slab

    ref = actor_net_reference(x, params)

    # Default path: bf16 matmuls, f32 output (matches the PyTorch module dtype).
    out = actor_net_forward(x, slab, state_dim, a_dim)
    out = jax.block_until_ready(out)
    assert out.shape == (batch, a_dim)
    assert out.dtype == jnp.float32
    assert jnp.allclose(out, ref, atol=2e-2, rtol=2e-2), "mismatch vs reference"

    # bf16 output path (halves HBM writeback of the dominant output stream).
    out_bf16 = actor_net_forward(x, slab, state_dim, a_dim,
                                 out_dtype=jnp.bfloat16)
    out_bf16 = jax.block_until_ready(out_bf16)
    assert out_bf16.dtype == jnp.bfloat16
    assert jnp.allclose(out_bf16.astype(jnp.float32), ref,
                        atol=3e-2, rtol=3e-2), "bf16-output mismatch"

    print("KERNEL_OK")
</pallas_src>

<mosaic_0001>
module attributes {stable_mosaic.version = 11 : i64} {
  func.func @_actor_kernel(%arg0: i32, %arg1: memref<416x128xbf16, #tpu.memory_space<vmem>>, %arg2: memref<8x16xf32, #tpu.memory_space<vmem>>, %arg3: memref<8x128xf32, #tpu.memory_space<vmem>>) attributes {dimension_semantics = [#tpu.dimension_semantics<parallel>], iteration_bounds = array<i64: 1>, scalar_prefetch = 0 : i64, scratch_operands = 0 : i64, tpu.core_type = #tpu.core_type<tc>, window_params = [{pipeline_mode = #tpu.pipeline_mode<synchronous>, transform_indices = @transform_0, window_bounds = array<i64: 416, 128>}, {transform_indices = @transform_1, window_bounds = array<i64: 8, 16>}, {transform_indices = @transform_2, window_bounds = array<i64: 8, 128>}]} {
    %c0 = arith.constant 0 : index
    %c0_0 = arith.constant 0 : index
    %0 = vector.load %arg2[%c0, %c0_0] : memref<8x16xf32, #tpu.memory_space<vmem>>, vector<8x16xf32>
    %1 = arith.truncf %0 : vector<8x16xf32> to vector<8x16xbf16>
    %c16 = arith.constant 16 : index
    %c0_1 = arith.constant 0 : index
    %2 = vector.load %arg1[%c16, %c0_1] : memref<416x128xbf16, #tpu.memory_space<vmem>>, vector<16x128xbf16>
    %cst = arith.constant dense<0.000000e+00> : vector<8x128xf32>
    %3 = tpu.matmul %1, %2, %cst {dimension_numbers = #tpu.dot_dimension_numbers<[1], [0], [0], [1], [0, 0, 1, 1], [], []>} : vector<8x16xbf16>, vector<16x128xbf16>, vector<8x128xf32> -> vector<8x128xf32>
    %c0_2 = arith.constant 0 : index
    %c0_3 = arith.constant 0 : index
    %4 = vector.load %arg1[%c0_2, %c0_3] : memref<416x128xbf16, #tpu.memory_space<vmem>>, vector<1x128xbf16>
    %5 = arith.extf %4 : vector<1x128xbf16> to vector<1x128xf32>
    %6 = vector.broadcast %5 : vector<1x128xf32> to vector<8x128xf32>
    %7 = arith.addf %3, %6 : vector<8x128xf32>
    %cst_4 = arith.constant 0.000000e+00 : f32
    %8 = vector.broadcast %cst_4 : f32 to vector<8x128xf32>
    %9 = arith.maximumf %7, %8 : vector<8x128xf32>
    %10 = arith.truncf %9 : vector<8x128xf32> to vector<8x128xbf16>
    %c32 = arith.constant 32 : index
    %c0_5 = arith.constant 0 : index
    %11 = vector.load %arg1[%c32, %c0_5] : memref<416x128xbf16, #tpu.memory_space<vmem>>, vector<128x128xbf16>
    %cst_6 = arith.constant dense<0.000000e+00> : vector<8x128xf32>
    %12 = tpu.matmul %10, %11, %cst_6 {dimension_numbers = #tpu.dot_dimension_numbers<[1], [0], [0], [1], [0, 0, 1, 1], [], []>} : vector<8x128xbf16>, vector<128x128xbf16>, vector<8x128xf32> -> vector<8x128xf32>
    %c1 = arith.constant 1 : index
    %c0_7 = arith.constant 0 : index
    %13 = vector.load %arg1[%c1, %c0_7] : memref<416x128xbf16, #tpu.memory_space<vmem>>, vector<1x128xbf16>
    %14 = arith.extf %13 : vector<1x128xbf16> to vector<1x128xf32>
    %15 = vector.broadcast %14 : vector<1x128xf32> to vector<8x128xf32>
    %16 = arith.addf %12, %15 : vector<8x128xf32>
    %cst_8 = arith.constant 0.000000e+00 : f32
    %17 = vector.broadcast %cst_8 : f32 to vector<8x128xf32>
    %18 = arith.maximumf %16, %17 : vector<8x128xf32>
    %19 = arith.truncf %18 : vector<8x128xf32> to vector<8x128xbf16>
    %c160 = arith.constant 160 : index
    %c0_9 = arith.constant 0 : index
    %20 = vector.load %arg1[%c160, %c0_9] : memref<416x128xbf16, #tpu.memory_space<vmem>>, vector<128x128xbf16>
    %cst_10 = arith.constant dense<0.000000e+00> : vector<8x128xf32>
    %21 = tpu.matmul %19, %20, %cst_10 {dimension_numbers = #tpu.dot_dimension_numbers<[1], [0], [0], [1], [0, 0, 1, 1], [], []>} : vector<8x128xbf16>, vector<128x128xbf16>, vector<8x128xf32> -> vector<8x128xf32>
    %c2 = arith.constant 2 : index
    %c0_11 = arith.constant 0 : index
    %22 = vector.load %arg1[%c2, %c0_11] : memref<416x128xbf16, #tpu.memory_space<vmem>>, vector<1x128xbf16>
    %23 = arith.extf %22 : vector<1x128xbf16> to vector<1x128xf32>
    %24 = vector.broadcast %23 : vector<1x128xf32> to vector<8x128xf32>
    %25 = arith.addf %21, %24 : vector<8x128xf32>
    %cst_12 = arith.constant 0.000000e+00 : f32
    %26 = vector.broadcast %cst_12 : f32 to vector<8x128xf32>
    %27 = arith.maximumf %25, %26 : vector<8x128xf32>
    %28 = arith.truncf %27 : vector<8x128xf32> to vector<8x128xbf16>
    %c288 = arith.constant 288 : index
    %c0_13 = arith.constant 0 : index
    %29 = vector.load %arg1[%c288, %c0_13] : memref<416x128xbf16, #tpu.memory_space<vmem>>, vector<128x128xbf16>
    %cst_14 = arith.constant dense<0.000000e+00> : vector<8x128xf32>
    %30 = tpu.matmul %28, %29, %cst_14 {dimension_numbers = #tpu.dot_dimension_numbers<[1], [0], [0], [1], [0, 0, 1, 1], [], []>} : vector<8x128xbf16>, vector<128x128xbf16>, vector<8x128xf32> -> vector<8x128xf32>
    %c3 = arith.constant 3 : index
    %c0_15 = arith.constant 0 : index
    %31 = vector.load %arg1[%c3, %c0_15] : memref<416x128xbf16, #tpu.memory_space<vmem>>, vector<1x128xbf16>
    %32 = arith.extf %31 : vector<1x128xbf16> to vector<1x128xf32>
    %33 = vector.broadcast %32 : vector<1x128xf32> to vector<8x128xf32>
    %34 = arith.addf %30, %33 : vector<8x128xf32>
    %cst_16 = arith.constant 5.000000e-01 : f32
    %35 = vector.broadcast %cst_16 : f32 to vector<8x128xf32>
    %36 = arith.mulf %35, %34 : vector<8x128xf32>
    %37 = math.tanh %36 : vector<8x128xf32>
    %cst_17 = arith.constant 1.000000e+00 : f32
    %38 = vector.broadcast %cst_17 : f32 to vector<8x128xf32>
    %39 = arith.addf %37, %38 : vector<8x128xf32>
    %cst_18 = arith.constant 5.000000e-01 : f32
    %40 = vector.broadcast %cst_18 : f32 to vector<8x128xf32>
    %41 = arith.mulf %40, %39 : vector<8x128xf32>
    %c0_19 = arith.constant 0 : index
    %c0_20 = arith.constant 0 : index
    %42 = vector.load %arg3[%c0_19, %c0_20] : memref<8x128xf32, #tpu.memory_space<vmem>>, vector<8x128xf32>
    tpu.vector_store %arg3[%c0_19, %c0_20], %41 {strides = array<i32>} : memref<8x128xf32, #tpu.memory_space<vmem>>, vector<8x128xf32>,
    return
  }
  func.func @transform_0(%arg0: i32) -> (i32, i32) {
    %c0_i32 = arith.constant 0 : i32
    %c0_i32_0 = arith.constant 0 : i32
    %c0_i32_1 = arith.constant 0 : i32
    return %c0_i32, %c0_i32_0 : i32, i32
  }
  func.func @transform_1(%arg0: i32) -> (i32, i32) {
    %c0_i32 = arith.constant 0 : i32
    %c0_i32_0 = arith.constant 0 : i32
    return %arg0, %c0_i32 : i32, i32
  }
  func.func @transform_2(%arg0: i32) -> (i32, i32) {
    %c0_i32 = arith.constant 0 : i32
    %c0_i32_0 = arith.constant 0 : i32
    return %arg0, %c0_i32 : i32, i32
  }
}

</mosaic_0001>

<llo_original>
// kernel: tpu_custom_call.1
$region0: #{tpu_custom_call.1}
  #allocation0 [shape = 'u32[]', space=smem, size = 0x4, offset = 0x4, fixed_abs, tag = 'smem constant byte address 0x4 - core index']
  #allocation1 [shape = 'u32[144,128]{1,0:T(1,128)}', space=vmem, size = 0x12000, scoped, tag = 'internal scratch']
  %s0 = inlined_call_operand.hbm [shape: bf16[416,128], index: 0, kind: input, shape index: {}]
  %s1 = inlined_call_operand.hbm [shape: f32[8,16], index: 1, kind: input, shape index: {}]
  %s2 = inlined_call_operand.hbm [shape: f32[8,128], index: 2, kind: output, shape index: {}]
  %s3 = sld [smem:[#allocation0]]
  $region26: #{tpu_custom_call.1} parent=0
    _
  %s5 = ssub.s32 1, %s3
  %s6 = scalar_select 0, %s5, %s3
  $region1: #{tpu_custom_call.1} parent=0
    #allocation2 [shape = 'u8[106496]{0}', space=vmem, size = 0x1a000, scoped, tag = 'input window, operand 0, single buffered']
    #allocation3 [shape = 's32[1]{0}', space=sflag, size = 0x4, scoped, tag = 'scoped memory for tpu_custom_call.1']
    #allocation4 [shape = 's32[1]{0}', space=sflag, size = 0x4, scoped, tag = 'scoped memory for tpu_custom_call.1']
    #allocation5 [shape = 'u8[4096]{0}', space=vmem, size = 0x1000, scoped, tag = 'input window, operand 1, single buffered']
    #allocation6 [shape = 's32[1]{0}', space=sflag, size = 0x4, scoped, tag = 'scoped memory for tpu_custom_call.1']
    #allocation7 [shape = 'u8[4096]{0}', space=vmem, size = 0x1000, scoped, tag = 'output window, operand 0, single buffered']
    %7 = vsyncpa [#allocation3], 0
    %8 = vsyncpa [#allocation6], 0
    %9 = vsyncpa [#allocation4], 0
    // Predicated region
    $region2: #{tpu_custom_call.1} parent=1 // pred_check
      _
    $region3: #{tpu_custom_call.1} parent=1 // pred_check_branch
      %11 = sbr.rel (0) target = $region5
    $region4: #{tpu_custom_call.1} parent=1 // pred_region
      %s13 = ssub.s32 3328, 3328
      %14 = vsyncadd [#allocation3], %s13
      %s15 = sshll.u32 [#allocation2], 4
      %s16 = int_to_ptr.vmem [resolvable:$true] %s15
      %21 = dma.hbm_to_vmem [thread:$0]  %s0, 3328, %s16, [#allocation3], 64, 64, 4
    $region5: #{tpu_custom_call.1} parent=1 // pred_fallthru
      _
    // Predicated region
    $region6: #{tpu_custom_call.1} parent=1 // pred_check
      _
    $region7: #{tpu_custom_call.1} parent=1 // pred_check_branch
      %23 = sbr.rel (0) target = $region9
    $region8: #{tpu_custom_call.1} parent=1 // pred_region
      %s25 = ssub.s32 128, 128
      %26 = vsyncadd [#allocation6], %s25
      %s28 = sshll.u32 [#allocation5], 4
      %s29 = int_to_ptr.vmem [resolvable:$true] %s28
      %31 = dma.hbm_to_vmem [thread:$0]  %s1, 128, %s29, [#allocation6]
    $region9: #{tpu_custom_call.1} parent=1 // pred_fallthru
      _
    // Predicated region
    $region10: #{tpu_custom_call.1} parent=1 // pred_check
      _
    $region11: #{tpu_custom_call.1} parent=1 // pred_check_branch
      %33 = sbr.rel (0) target = $region13
    $region12: #{tpu_custom_call.1} parent=1 // pred_region
      %34 = dma.done [#allocation3], 3328
    $region13: #{tpu_custom_call.1} parent=1 // pred_fallthru
      _
    // Predicated region
    $region14: #{tpu_custom_call.1} parent=1 // pred_check
      _
    $region15: #{tpu_custom_call.1} parent=1 // pred_check_branch
      %36 = sbr.rel (0) target = $region17
    $region16: #{tpu_custom_call.1} parent=1 // pred_region
      %37 = dma.done [#allocation6], 128
    $region17: #{tpu_custom_call.1} parent=1 // pred_fallthru
      _
    %v39 = vld [vmem:[#allocation5] sm:$0xff]
    %v40 = vpack.c.bf16 %v39, %v39
    %v41 = vld [vmem:[#allocation2 + $0x8] sm:$0xf]
    %v42 = vld [vmem:[#allocation2 + $0xc] sm:$0xf]
    %v43 = vld [vmem:[#allocation2] sm:$0x1]
    %v44 = vunpack.c.l.bf16 %v43
    %v45 = vlaneseq
    %v46 = vshrl.u32 %v45, 7
    %v47 = vsub.s32 0, %v46
    %v48 = vrot.slane %v44, %v47
    %v51 = vunpack.c.l.b16 %v41
    %v52 = vunpack.c.l.b16 %v42
    %v53 = vpack.c.b16 %v52, %v51
    %vm55 = vcmask 130048
    %v57 = vsel %vm55, %v40, 0
    %59 = vmatprep.subr.bf16.mxu0 0
    %60 = vmatpush1.bf16.msra.mxu0 %v53
    %61 = vmatprep.subr.bf16.mxu0 0
    %62 = vmatpush1.bf16.msra.mxu0 0
    %63 = vmatprep.subr.bf16.mxu0 0
    %64 = vmatpush1.bf16.msra.mxu0 0
    %65 = vmatprep.subr.bf16.mxu0 0
    %66 = vmatpush1.bf16.msra.mxu0 0
    %67 = vmatprep.subr.bf16.mxu0 0
    %68 = vmatpush1.bf16.msra.mxu0 0
    %69 = vmatprep.subr.bf16.mxu0 0
    %70 = vmatpush1.bf16.msra.mxu0 0
    %71 = vmatprep.subr.bf16.mxu0 0
    %72 = vmatpush1.bf16.msra.mxu0 0
    %73 = vmatprep.subr.bf16.mxu0 0
    %74 = vmatpush1.bf16.msra.mxu0 0
    %75 = vmatprep.subr.bf16.mxu0 0
    %76 = vmatpush1.bf16.msra.mxu0 0
    %77 = vmatprep.subr.bf16.mxu0 0
    %78 = vmatpush1.bf16.msra.mxu0 0
    %79 = vmatprep.subr.bf16.mxu0 0
    %80 = vmatpush1.bf16.msra.mxu0 0
    %81 = vmatprep.subr.bf16.mxu0 0
    %82 = vmatpush1.bf16.msra.mxu0 0
    %83 = vmatprep.subr.bf16.mxu0 0
    %84 = vmatpush1.bf16.msra.mxu0 0
    %85 = vmatprep.subr.bf16.mxu0 0
    %86 = vmatpush1.bf16.msra.mxu0 0
    %87 = vmatprep.subr.bf16.mxu0 0
    %88 = vmatpush1.bf16.msra.mxu0 0
    %89 = vmatprep.subr.bf16.mxu0 0
    %90 = vmatpush1.bf16.msra.mxu0 0
    %91 = vmatprep.mubr.bf16.mxu0 0
    %92 = vmatmul.mubr.bf16.gmra.mrb[0].mxu0 %v57
    %v93 = vpop.f32.mrb[0].mxu0
    %v94 = vadd.f32 %v48, %v93
    %v95 = vpop.f32.mrb[0].mxu0
    %v96 = vpop.f32.mrb[0].mxu0
    %v97 = vpop.f32.mrb[0].mxu0
    %98 = vdwg.mxu0
    %v99 = vmax.f32 %v94, 0.0
    %v100 = vpack.c.bf16 %v99, %v99
    %v101 = vld [vmem:[#allocation2 + $0x10] sm:$0xf]
    %v102 = vld [vmem:[#allocation2 + $0x14] sm:$0xf]
    %v103 = vld [vmem:[#allocation2 + $0x18] sm:$0xf]
    %v104 = vld [vmem:[#allocation2 + $0x1c] sm:$0xf]
    %v105 = vld [vmem:[#allocation2 + $0x20] sm:$0xf]
    %v106 = vld [vmem:[#allocation2 + $0x24] sm:$0xf]
    %v107 = vld [vmem:[#allocation2 + $0x28] sm:$0xf]
    %v108 = vld [vmem:[#allocation2 + $0x2c] sm:$0xf]
    %v109 = vld [vmem:[#allocation2 + $0x30] sm:$0xf]
    %v110 = vld [vmem:[#allocation2 + $0x34] sm:$0xf]
    %v111 = vld [vmem:[#allocation2 + $0x38] sm:$0xf]
    %v112 = vld [vmem:[#allocation2 + $0x3c] sm:$0xf]
    %v113 = vld [vmem:[#allocation2 + $0x40] sm:$0xf]
    %v114 = vld [vmem:[#allocation2 + $0x44] sm:$0xf]
    %v115 = vld [vmem:[#allocation2 + $0x48] sm:$0xf]
    %v116 = vld [vmem:[#allocation2 + $0x4c] sm:$0xf]
    %v117 = vlaneseq
    %v118 = vshrl.u32 %v117, 7
    %v119 = vsub.s32 1, %v118
    %v120 = vrot.slane %v44, %v119
    %v137 = vunpack.c.l.b16 %v101
    %v138 = vunpack.c.l.b16 %v102
    %v139 = vunpack.c.l.b16 %v103
    %v140 = vunpack.c.l.b16 %v104
    %v141 = vunpack.c.l.b16 %v105
    %v142 = vunpack.c.l.b16 %v106
    %v143 = vunpack.c.l.b16 %v107
    %v144 = vunpack.c.l.b16 %v108
    %v145 = vunpack.c.l.b16 %v109
    %v146 = vunpack.c.l.b16 %v110
    %v147 = vunpack.c.l.b16 %v111
    %v148 = vunpack.c.l.b16 %v112
    %v149 = vunpack.c.l.b16 %v113
    %v150 = vunpack.c.l.b16 %v114
    %v151 = vunpack.c.l.b16 %v115
    %v152 = vunpack.c.l.b16 %v116
    %v153 = vpack.c.b16 %v138, %v137
    %v154 = vpack.c.b16 %v140, %v139
    %v155 = vpack.c.b16 %v142, %v141
    %v156 = vpack.c.b16 %v144, %v143
    %v157 = vpack.c.b16 %v146, %v145
    %v158 = vpack.c.b16 %v148, %v147
    %v159 = vpack.c.b16 %v150, %v149
    %v160 = vpack.c.b16 %v152, %v151
    %169 = vmatprep.subr.bf16.mxu0 0
    %170 = vmatpush1.bf16.msra.mxu0 %v153
    %171 = vmatprep.subr.bf16.mxu0 0
    %172 = vmatpush1.bf16.msra.mxu0 %v154
    %173 = vmatprep.subr.bf16.mxu0 0
    %174 = vmatpush1.bf16.msra.mxu0 %v155
    %175 = vmatprep.subr.bf16.mxu0 0
    %176 = vmatpush1.bf16.msra.mxu0 %v156
    %177 = vmatprep.subr.bf16.mxu0 0
    %178 = vmatpush1.bf16.msra.mxu0 %v157
    %179 = vmatprep.subr.bf16.mxu0 0
    %180 = vmatpush1.bf16.msra.mxu0 %v158
    %181 = vmatprep.subr.bf16.mxu0 0
    %182 = vmatpush1.bf16.msra.mxu0 %v159
    %183 = vmatprep.subr.bf16.mxu0 0
    %184 = vmatpush1.bf16.msra.mxu0 %v160
    %185 = vmatprep.subr.bf16.mxu0 0
    %186 = vmatpush1.bf16.msra.mxu0 0
    %187 = vmatprep.subr.bf16.mxu0 0
    %188 = vmatpush1.bf16.msra.mxu0 0
    %189 = vmatprep.subr.bf16.mxu0 0
    %190 = vmatpush1.bf16.msra.mxu0 0
    %191 = vmatprep.subr.bf16.mxu0 0
    %192 = vmatpush1.bf16.msra.mxu0 0
    %193 = vmatprep.subr.bf16.mxu0 0
    %194 = vmatpush1.bf16.msra.mxu0 0
    %195 = vmatprep.subr.bf16.mxu0 0
    %196 = vmatpush1.bf16.msra.mxu0 0
    %197 = vmatprep.subr.bf16.mxu0 0
    %198 = vmatpush1.bf16.msra.mxu0 0
    %199 = vmatprep.subr.bf16.mxu0 0
    %200 = vmatpush1.bf16.msra.mxu0 0
    %201 = vmatprep.mubr.bf16.mxu0 0
    %202 = vmatmul.mubr.bf16.gmra.mrb[0].mxu0 %v100
    %v203 = vpop.f32.mrb[0].mxu0
    %v204 = vadd.f32 %v120, %v203
    %v205 = vpop.f32.mrb[0].mxu0
    %v206 = vpop.f32.mrb[0].mxu0
    %v207 = vpop.f32.mrb[0].mxu0
    %208 = vdwg.mxu0
    %v209 = vmax.f32 %v204, 0.0
    %v210 = vpack.c.bf16 %v209, %v209
    %v211 = vld [vmem:[#allocation2 + $0x50] sm:$0xf]
    %v212 = vld [vmem:[#allocation2 + $0x54] sm:$0xf]
    %v213 = vld [vmem:[#allocation2 + $0x58] sm:$0xf]
    %v214 = vld [vmem:[#allocation2 + $0x5c] sm:$0xf]
    %v215 = vld [vmem:[#allocation2 + $0x60] sm:$0xf]
    %v216 = vld [vmem:[#allocation2 + $0x64] sm:$0xf]
    %v217 = vld [vmem:[#allocation2 + $0x68] sm:$0xf]
    %v218 = vld [vmem:[#allocation2 + $0x6c] sm:$0xf]
    %v219 = vld [vmem:[#allocation2 + $0x70] sm:$0xf]
    %v220 = vld [vmem:[#allocation2 + $0x74] sm:$0xf]
    %v221 = vld [vmem:[#allocation2 + $0x78] sm:$0xf]
    %v222 = vld [vmem:[#allocation2 + $0x7c] sm:$0xf]
    %v223 = vld [vmem:[#allocation2 + $0x80] sm:$0xf]
    %v224 = vld [vmem:[#allocation2 + $0x84] sm:$0xf]
    %v225 = vld [vmem:[#allocation2 + $0x88] sm:$0xf]
    %v226 = vld [vmem:[#allocation2 + $0x8c] sm:$0xf]
    %v227 = vld [vmem:[#allocation2] sm:$0x2]
    %v228 = vunpack.c.l.bf16 %v227
    %v229 = vlaneseq
    %v230 = vshrl.u32 %v229, 7
    %v231 = vsub.s32 2, %v230
    %v232 = vrot.slane %v228, %v231
    %v249 = vunpack.c.l.b16 %v211
    %v250 = vunpack.c.l.b16 %v212
    %v251 = vunpack.c.l.b16 %v213
    %v252 = vunpack.c.l.b16 %v214
    %v253 = vunpack.c.l.b16 %v215
    %v254 = vunpack.c.l.b16 %v216
    %v255 = vunpack.c.l.b16 %v217
    %v256 = vunpack.c.l.b16 %v218
    %v257 = vunpack.c.l.b16 %v219
    %v258 = vunpack.c.l.b16 %v220
    %v259 = vunpack.c.l.b16 %v221
    %v260 = vunpack.c.l.b16 %v222
    %v261 = vunpack.c.l.b16 %v223
    %v262 = vunpack.c.l.b16 %v224
    %v263 = vunpack.c.l.b16 %v225
    %v264 = vunpack.c.l.b16 %v226
    %v265 = vpack.c.b16 %v250, %v249
    %v266 = vpack.c.b16 %v252, %v251
    %v267 = vpack.c.b16 %v254, %v253
    %v268 = vpack.c.b16 %v256, %v255
    %v269 = vpack.c.b16 %v258, %v257
    %v270 = vpack.c.b16 %v260, %v259
    %v271 = vpack.c.b16 %v262, %v261
    %v272 = vpack.c.b16 %v264, %v263
    %281 = vmatprep.subr.bf16.mxu0 0
    %282 = vmatpush1.bf16.msra.mxu0 %v265
    %283 = vmatprep.subr.bf16.mxu0 0
    %284 = vmatpush1.bf16.msra.mxu0 %v266
    %285 = vmatprep.subr.bf16.mxu0 0
    %286 = vmatpush1.bf16.msra.mxu0 %v267
    %287 = vmatprep.subr.bf16.mxu0 0
    %288 = vmatpush1.bf16.msra.mxu0 %v268
    %289 = vmatprep.subr.bf16.mxu0 0
    %290 = vmatpush1.bf16.msra.mxu0 %v269
    %291 = vmatprep.subr.bf16.mxu0 0
    %292 = vmatpush1.bf16.msra.mxu0 %v270
    %293 = vmatprep.subr.bf16.mxu0 0
    %294 = vmatpush1.bf16.msra.mxu0 %v271
    %295 = vmatprep.subr.bf16.mxu0 0
    %296 = vmatpush1.bf16.msra.mxu0 %v272
    %297 = vmatprep.subr.bf16.mxu0 0
    %298 = vmatpush1.bf16.msra.mxu0 0
    %299 = vmatprep.subr.bf16.mxu0 0
    %300 = vmatpush1.bf16.msra.mxu0 0
    %301 = vmatprep.subr.bf16.mxu0 0
    %302 = vmatpush1.bf16.msra.mxu0 0
    %303 = vmatprep.subr.bf16.mxu0 0
    %304 = vmatpush1.bf16.msra.mxu0 0
    %305 = vmatprep.subr.bf16.mxu0 0
    %306 = vmatpush1.bf16.msra.mxu0 0
    %307 = vmatprep.subr.bf16.mxu0 0
    %308 = vmatpush1.bf16.msra.mxu0 0
    %309 = vmatprep.subr.bf16.mxu0 0
    %310 = vmatpush1.bf16.msra.mxu0 0
    %311 = vmatprep.subr.bf16.mxu0 0
    %312 = vmatpush1.bf16.msra.mxu0 0
    %313 = vmatprep.mubr.bf16.mxu0 0
    %314 = vmatmul.mubr.bf16.gmra.mrb[0].mxu0 %v210
    %v315 = vpop.f32.mrb[0].mxu0
    %v316 = vadd.f32 %v232, %v315
    %v317 = vpop.f32.mrb[0].mxu0
    %v318 = vpop.f32.mrb[0].mxu0
    %v319 = vpop.f32.mrb[0].mxu0
    %320 = vdwg.mxu0
    %v321 = vmax.f32 %v316, 0.0
    %v322 = vpack.c.bf16 %v321, %v321
    %v323 = vld [vmem:[#allocation2 + $0x90] sm:$0xf]
    %v324 = vld [vmem:[#allocation2 + $0x94] sm:$0xf]
    %v325 = vld [vmem:[#allocation2 + $0x98] sm:$0xf]
    %v326 = vld [vmem:[#allocation2 + $0x9c] sm:$0xf]
    %v327 = vld [vmem:[#allocation2 + $0xa0] sm:$0xf]
    %v328 = vld [vmem:[#allocation2 + $0xa4] sm:$0xf]
    %v329 = vld [vmem:[#allocation2 + $0xa8] sm:$0xf]
    %v330 = vld [vmem:[#allocation2 + $0xac] sm:$0xf]
    %v331 = vld [vmem:[#allocation2 + $0xb0] sm:$0xf]
    %v332 = vld [vmem:[#allocation2 + $0xb4] sm:$0xf]
    %v333 = vld [vmem:[#allocation2 + $0xb8] sm:$0xf]
    %v334 = vld [vmem:[#allocation2 + $0xbc] sm:$0xf]
    %v335 = vld [vmem:[#allocation2 + $0xc0] sm:$0xf]
    %v336 = vld [vmem:[#allocation2 + $0xc4] sm:$0xf]
    %v337 = vld [vmem:[#allocation2 + $0xc8] sm:$0xf]
    %v338 = vld [vmem:[#allocation2 + $0xcc] sm:$0xf]
    %v339 = vlaneseq
    %v340 = vshrl.u32 %v339, 7
    %v341 = vsub.s32 3, %v340
    %v342 = vrot.slane %v228, %v341
    %v359 = vunpack.c.l.b16 %v323
    %v360 = vunpack.c.l.b16 %v324
    %v361 = vunpack.c.l.b16 %v325
    %v362 = vunpack.c.l.b16 %v326
    %v363 = vunpack.c.l.b16 %v327
    %v364 = vunpack.c.l.b16 %v328
    %v365 = vunpack.c.l.b16 %v329
    %v366 = vunpack.c.l.b16 %v330
    %v367 = vunpack.c.l.b16 %v331
    %v368 = vunpack.c.l.b16 %v332
    %v369 = vunpack.c.l.b16 %v333
    %v370 = vunpack.c.l.b16 %v334
    %v371 = vunpack.c.l.b16 %v335
    %v372 = vunpack.c.l.b16 %v336
    %v373 = vunpack.c.l.b16 %v337
    %v374 = vunpack.c.l.b16 %v338
    %v375 = vpack.c.b16 %v360, %v359
    %v376 = vpack.c.b16 %v362, %v361
    %v377 = vpack.c.b16 %v364, %v363
    %v378 = vpack.c.b16 %v366, %v365
    %v379 = vpack.c.b16 %v368, %v367
    %v380 = vpack.c.b16 %v370, %v369
    %v381 = vpack.c.b16 %v372, %v371
    %v382 = vpack.c.b16 %v374, %v373
    %391 = vmatprep.subr.bf16.mxu0 0
    %392 = vmatpush1.bf16.msra.mxu0 %v375
    %393 = vmatprep.subr.bf16.mxu0 0
    %394 = vmatpush1.bf16.msra.mxu0 %v376
    %395 = vmatprep.subr.bf16.mxu0 0
    %396 = vmatpush1.bf16.msra.mxu0 %v377
    %397 = vmatprep.subr.bf16.mxu0 0
    %398 = vmatpush1.bf16.msra.mxu0 %v378
    %399 = vmatprep.subr.bf16.mxu0 0
    %400 = vmatpush1.bf16.msra.mxu0 %v379
    %401 = vmatprep.subr.bf16.mxu0 0
    %402 = vmatpush1.bf16.msra.mxu0 %v380
    %403 = vmatprep.subr.bf16.mxu0 0
    %404 = vmatpush1.bf16.msra.mxu0 %v381
    %405 = vmatprep.subr.bf16.mxu0 0
    %406 = vmatpush1.bf16.msra.mxu0 %v382
    %407 = vmatprep.subr.bf16.mxu0 0
    %408 = vmatpush1.bf16.msra.mxu0 0
    %409 = vmatprep.subr.bf16.mxu0 0
    %410 = vmatpush1.bf16.msra.mxu0 0
    %411 = vmatprep.subr.bf16.mxu0 0
    %412 = vmatpush1.bf16.msra.mxu0 0
    %413 = vmatprep.subr.bf16.mxu0 0
    %414 = vmatpush1.bf16.msra.mxu0 0
    %415 = vmatprep.subr.bf16.mxu0 0
    %416 = vmatpush1.bf16.msra.mxu0 0
    %417 = vmatprep.subr.bf16.mxu0 0
    %418 = vmatpush1.bf16.msra.mxu0 0
    %419 = vmatprep.subr.bf16.mxu0 0
    %420 = vmatpush1.bf16.msra.mxu0 0
    %421 = vmatprep.subr.bf16.mxu0 0
    %422 = vmatpush1.bf16.msra.mxu0 0
    %423 = vmatprep.mubr.bf16.mxu0 0
    %424 = vmatmul.mubr.bf16.gmra.mrb[0].mxu0 %v322
    %v425 = vpop.f32.mrb[0].mxu0
    %v426 = vadd.f32 %v342, %v425
    %v427 = vpop.f32.mrb[0].mxu0
    %v428 = vpop.f32.mrb[0].mxu0
    %v429 = vpop.f32.mrb[0].mxu0
    %430 = vdwg.mxu0
    %v431 = vmul.f32 %v426, 0.5
    %v432 = vtanh.pop %v431
    %v433 = vadd.f32 %v432, 1.0
    %v434 = vmul.f32 %v433, 0.5
    %435 = vst [vmem:[#allocation7] sm:$0xff] %v434
    // Predicated region
    $region18: #{tpu_custom_call.1} parent=1 // pred_check
      _
    $region19: #{tpu_custom_call.1} parent=1 // pred_check_branch
      %437 = sbr.rel (0) target = $region21
    $region20: #{tpu_custom_call.1} parent=1 // pred_region
      %s439 = ssub.s32 128, 128
      %440 = vsyncadd [#allocation4], %s439
      %s442 = sshll.u32 [#allocation7], 4
      %s443 = int_to_ptr.vmem [resolvable:$true] %s442
      %445 = dma.vmem_to_hbm [thread:$0]  %s443, 128, %s2, [#allocation4]
    $region21: #{tpu_custom_call.1} parent=1 // pred_fallthru
      _
    // Predicated region
    $region22: #{tpu_custom_call.1} parent=1 // pred_check
      _
    $region23: #{tpu_custom_call.1} parent=1 // pred_check_branch
      %447 = sbr.rel (0) target = $region25
    $region24: #{tpu_custom_call.1} parent=1 // pred_region
      %448 = dma.done [#allocation4], 128
    $region25: #{tpu_custom_call.1} parent=1 // pred_fallthru
      _
    %449 = vsyncpa [#allocation3], 1
    %450 = vsyncpa [#allocation6], 1
    %451 = vsyncpa [#allocation4], 1

</llo_original>
